<compile_context>
chip_gen: v7x
topology: tpu7x:2x2x1
jax: 0.10.0
libtpu: 0.0.40
codegen_flags: <defaults>
</compile_context>

<pallas_src>
import jax
import jax.numpy as jnp
from jax import lax
from jax.experimental import pallas as pl
from jax.experimental.pallas import tpu as pltpu
import numpy as np

EPS = 1e-5


# ----------------------------- Pallas kernel -----------------------------

def _fused_deconv_bn_relu_kernel(x_ref, w_ref, scale_ref, shift_ref, o_ref):
    """One (batch, spatial-tile) block: fused transposed conv + BN affine + ReLU.

    x_ref:     (1, Cin, TM)  bf16  activation tile (channels on sublanes, spatial on lanes)
    w_ref:     (C8, Cin)     bf16  fused weight matrix, C8 = s^3*Cout (VMEM resident)
    scale_ref: (C8, 1)       f32   folded BN scale per fused output row
    shift_ref: (C8, 1)       f32   folded BN shift per fused output row
    o_ref:     (1, C8, TM)         output tile (lane-dense stores)
    """
    xt = x_ref[0, :, :]                                                   # (Cin, TM)
    ht = jnp.dot(w_ref[...], xt, preferred_element_type=jnp.float32)     # (C8, TM) f32
    y = jnp.maximum(ht * scale_ref[...] + shift_ref[...], 0.0)
    o_ref[0, :, :] = y.astype(o_ref.dtype)


# ----------------------------- helpers -----------------------------

def _choose_spatial_tile(dhw, requested, n_batch, min_tiles=8):
    """Lane-aligned spatial tile: largest multiple of 128 dividing dhw, <= requested,
    but shrunk (down to 512) if needed so the grid has enough tiles for megacore."""
    if dhw % 128 != 0:
        return dhw                      # full-extent block satisfies the lane rule
    tm = min(requested, dhw)
    tm -= tm % 128
    tm = max(tm, 128)
    while dhw % tm != 0:
        tm -= 128
    # keep >= min_tiles grid steps when possible (v7x: both TCs busy), floor 512 for DMA size
    while (n_batch * (dhw // tm) < min_tiles and tm // 2 >= 512
           and (tm // 2) % 128 == 0 and dhw % (tm // 2) == 0):
        tm //= 2
    return tm


# ----------------------------- wrapper -----------------------------

def upsampling_forward(x_ncdhw, params, stride=2, normalization="batchnorm",
                       mode_upsampling=0, tile_m=2048, out_dtype=None):
    if mode_upsampling != 0:
        # TODO(synk): modes 1/2 (trilinear / nearest Upsample + 3x3x3 Conv3d) not implemented.
        raise NotImplementedError("only mode_upsampling=0 (ConvTranspose3d) is implemented")
    if normalization != "batchnorm":
        # TODO(synk): groupnorm / instancenorm / 'none' normalization branches not implemented.
        raise NotImplementedError("only normalization='batchnorm' is implemented")

    w = params["w"]          # (Cin, Cout, s, s, s)  -- PyTorch ConvTranspose3d layout
    gamma = params["gamma"]  # (Cout,)
    beta = params["beta"]    # (Cout,)
    # params["b"] (conv bias) is intentionally unused: train-mode BatchNorm absorbs a
    # per-channel constant into the mean, so dropping it leaves the output unchanged.

    N, Cin, D, H, W = x_ncdhw.shape
    s = stride
    Cout = w.shape[1]
    assert w.shape == (Cin, Cout, s, s, s)
    s3 = s * s * s
    C8 = s3 * Cout                      # fused rows: tap-major, channel-minor
    DHW = D * H * W
    M = N * DHW
    if out_dtype is None:
        out_dtype = x_ncdhw.dtype

    # ---- fused weight matrix: row = ((kd*s+kh)*s+kw)*Cout + c, col = ci ----
    w_t = jnp.transpose(w, (2, 3, 4, 1, 0)).reshape(C8, Cin)            # f32
    w_bf = w_t.astype(jnp.bfloat16)

    # ---- activations: (N, Cin, DHW), bf16 for the MXU (no pre-transpose needed) ----
    x3 = x_ncdhw.reshape(N, Cin, DHW).astype(jnp.bfloat16)

    # ---- analytical train-mode BN statistics (tiny XLA ops; no h round-trip) ----
    # Use the bf16-quantized values so the stats match what the kernel computes.
    hp = lax.Precision.HIGHEST
    xf = x3.astype(jnp.float32)                                          # (N, Cin, DHW)
    wq = w_bf.astype(jnp.float32)                                        # (C8, Cin)
    mu_x = jnp.sum(xf, axis=(0, 2)) / jnp.float32(M)                     # (Cin,)
    xc = xf - mu_x.reshape(1, Cin, 1)
    gram_c = jnp.einsum("nip,njp->ij", xc, xc, precision=hp)             # (Cin, Cin)
    m_cols = jnp.dot(wq, mu_x, precision=hp)                             # (C8,) per-column mean
    var_cols = jnp.sum(jnp.dot(wq, gram_c, precision=hp) * wq, axis=1) / jnp.float32(M)
    m_taps = m_cols.reshape(s3, Cout)
    v_taps = var_cols.reshape(s3, Cout)
    mean_c = jnp.mean(m_taps, axis=0)                                    # (Cout,)
    var_c = jnp.mean(v_taps, axis=0) + jnp.mean((m_taps - mean_c) ** 2, axis=0)
    scale_c = gamma.astype(jnp.float32) * lax.rsqrt(var_c + EPS)
    shift_c = beta.astype(jnp.float32) - mean_c * scale_c
    scale_rows = jnp.tile(scale_c, (s3,)).reshape(C8, 1)                 # row = tap*Cout + c
    shift_rows = jnp.tile(shift_c, (s3,)).reshape(C8, 1)

    # ---- single Pallas pass: matmul -> BN affine -> ReLU -> lane-dense store ----
    tm = _choose_spatial_tile(DHW, tile_m, N)
    num_sp = DHW // tm
    out_itemsize = jnp.dtype(out_dtype).itemsize
    cparams = pltpu.CompilerParams(
        dimension_semantics=("parallel", "parallel"),
        vmem_limit_bytes=48 * 1024 * 1024,
    )
    cost = pl.CostEstimate(
        flops=2 * M * Cin * C8 + 3 * M * C8,
        transcendentals=0,
        bytes_accessed=M * Cin * 2 + M * C8 * out_itemsize + C8 * Cin * 2 + 2 * C8 * 4,
    )

    out3 = pl.pallas_call(
        _fused_deconv_bn_relu_kernel,
        grid=(N, num_sp),
        in_specs=[
            pl.BlockSpec((1, Cin, tm), lambda n, j: (n, 0, j)),
            pl.BlockSpec((C8, Cin), lambda n, j: (0, 0)),
            pl.BlockSpec((C8, 1), lambda n, j: (0, 0)),
            pl.BlockSpec((C8, 1), lambda n, j: (0, 0)),
        ],
        out_specs=pl.BlockSpec((1, C8, tm), lambda n, j: (n, 0, j)),
        out_shape=jax.ShapeDtypeStruct((N, C8, DHW), out_dtype),
        compiler_params=cparams,
        cost_estimate=cost,
    )(x3, w_bf, scale_rows, shift_rows)

    # ---- depth-to-space back to NCDHW (the only XLA epilogue; pure layout) ----
    out = out3.reshape(N, s, s, s, Cout, D, H, W)                 # (n, kd, kh, kw, c, d, h, w)
    out = jnp.transpose(out, (0, 4, 5, 1, 6, 2, 7, 3))            # (n, c, d, kd, h, kh, w, kw)
    return out.reshape(N, Cout, D * s, H * s, W * s)


# ----------------------------- reference (pure JAX) -----------------------------

def reference_upsampling(x, params, stride=2):
    w, b = params["w"], params["b"]
    gamma, beta = params["gamma"], params["beta"]
    s = stride
    # ConvTranspose3d == lhs-dilated conv with spatially-flipped, IO-swapped kernel.
    w_conv = jnp.transpose(w, (1, 0, 2, 3, 4))[:, :, ::-1, ::-1, ::-1]
    h = lax.conv_general_dilated(
        x, w_conv, window_strides=(1, 1, 1),
        padding=[(s - 1, s - 1)] * 3, lhs_dilation=(s, s, s),
        dimension_numbers=("NCDHW", "OIDHW", "NCDHW"),
        precision=lax.Precision.HIGHEST)
    h = h + b.reshape(1, -1, 1, 1, 1)
    mu = jnp.mean(h, axis=(0, 2, 3, 4), keepdims=True)
    var = jnp.mean((h - mu) ** 2, axis=(0, 2, 3, 4), keepdims=True)
    hn = (h - mu) * lax.rsqrt(var + EPS)
    return jax.nn.relu(hn * gamma.reshape(1, -1, 1, 1, 1) + beta.reshape(1, -1, 1, 1, 1))


# ----------------------------- main -----------------------------

if __name__ == "__main__":
    key = jax.random.PRNGKey(0)
    ks = jax.random.split(key, 5)

    # Small shapes consistent with the module defaults (stride=2, mode_upsampling=0).
    N, Cin, Cout, D, H, W, s = 2, 8, 16, 8, 8, 8, 2

    x = jax.random.normal(ks[0], (N, Cin, D, H, W), jnp.float32)
    params = {
        "w": 0.1 * jax.random.normal(ks[1], (Cin, Cout, s, s, s), jnp.float32),
        "b": 0.1 * jax.random.normal(ks[2], (Cout,), jnp.float32),
        "gamma": 1.0 + 0.1 * jax.random.normal(ks[3], (Cout,), jnp.float32),
        "beta": 0.1 * jax.random.normal(ks[4], (Cout,), jnp.float32),
    }

    fwd = jax.jit(lambda xx: upsampling_forward(xx, params, stride=s))
    out = jax.block_until_ready(fwd(x))
    assert out.shape == (N, Cout, D * s, H * s, W * s), out.shape

    ref = jax.block_until_ready(reference_upsampling(x, params, stride=s))
    # bf16 MXU inputs vs f32 reference: ~0.5% expected deviation after BN.
    np.testing.assert_allclose(np.asarray(out), np.asarray(ref), rtol=2e-2, atol=2e-2)

    print("KERNEL_OK")
</pallas_src>

<mosaic_0001>
module attributes {stable_mosaic.version = 11 : i64} {
  func.func @_fused_deconv_bn_relu_kernel(%arg0: i32, %arg1: i32, %arg2: memref<1x8x512xbf16, #tpu.memory_space<vmem>>, %arg3: memref<128x8xbf16, #tpu.memory_space<vmem>>, %arg4: memref<128x1xf32, #tpu.memory_space<vmem>>, %arg5: memref<128x1xf32, #tpu.memory_space<vmem>>, %arg6: memref<1x128x512xf32, #tpu.memory_space<vmem>>) attributes {dimension_semantics = [#tpu.dimension_semantics<parallel>, #tpu.dimension_semantics<parallel>], iteration_bounds = array<i64: 2, 1>, scalar_prefetch = 0 : i64, scratch_operands = 0 : i64, tpu.core_type = #tpu.core_type<tc>, window_params = [{transform_indices = @transform_0, window_bounds = array<i64: 1, 8, 512>}, {pipeline_mode = #tpu.pipeline_mode<synchronous>, transform_indices = @transform_1, window_bounds = array<i64: 128, 8>}, {pipeline_mode = #tpu.pipeline_mode<synchronous>, transform_indices = @transform_2, window_bounds = array<i64: 128, 1>}, {pipeline_mode = #tpu.pipeline_mode<synchronous>, transform_indices = @transform_3, window_bounds = array<i64: 128, 1>}, {transform_indices = @transform_4, window_bounds = array<i64: 1, 128, 512>}]} {
    %c0 = arith.constant 0 : index
    %c0_0 = arith.constant 0 : index
    %c0_1 = arith.constant 0 : index
    %0 = vector.load %arg2[%c0, %c0_0, %c0_1] : memref<1x8x512xbf16, #tpu.memory_space<vmem>>, vector<1x8x512xbf16>
    %1 = vector.shape_cast %0 : vector<1x8x512xbf16> to vector<8x512xbf16>
    %c0_2 = arith.constant 0 : index
    %c0_3 = arith.constant 0 : index
    %2 = vector.load %arg3[%c0_2, %c0_3] : memref<128x8xbf16, #tpu.memory_space<vmem>>, vector<128x8xbf16>
    %cst = arith.constant dense<0.000000e+00> : vector<128x512xf32>
    %3 = tpu.matmul %2, %1, %cst {dimension_numbers = #tpu.dot_dimension_numbers<[1], [0], [0], [1], [0, 0, 1, 1], [], []>} : vector<128x8xbf16>, vector<8x512xbf16>, vector<128x512xf32> -> vector<128x512xf32>
    %c0_4 = arith.constant 0 : index
    %c0_5 = arith.constant 0 : index
    %4 = vector.load %arg4[%c0_4, %c0_5] : memref<128x1xf32, #tpu.memory_space<vmem>>, vector<128x1xf32>
    %5 = vector.broadcast %4 : vector<128x1xf32> to vector<128x512xf32>
    %6 = arith.mulf %3, %5 : vector<128x512xf32>
    %c0_6 = arith.constant 0 : index
    %c0_7 = arith.constant 0 : index
    %7 = vector.load %arg5[%c0_6, %c0_7] : memref<128x1xf32, #tpu.memory_space<vmem>>, vector<128x1xf32>
    %8 = vector.broadcast %7 : vector<128x1xf32> to vector<128x512xf32>
    %9 = arith.addf %6, %8 : vector<128x512xf32>
    %cst_8 = arith.constant 0.000000e+00 : f32
    %10 = vector.broadcast %cst_8 : f32 to vector<128x512xf32>
    %11 = arith.maximumf %9, %10 : vector<128x512xf32>
    %c0_9 = arith.constant 0 : index
    %c0_10 = arith.constant 0 : index
    %c0_11 = arith.constant 0 : index
    %12 = vector.load %arg6[%c0_9, %c0_10, %c0_11] : memref<1x128x512xf32, #tpu.memory_space<vmem>>, vector<1x128x512xf32>
    %13 = vector.shape_cast %12 : vector<1x128x512xf32> to vector<128x512xf32>
    %14 = vector.shape_cast %11 : vector<128x512xf32> to vector<1x128x512xf32>
    tpu.vector_store %arg6[%c0_9, %c0_10, %c0_11], %14 {strides = array<i32>} : memref<1x128x512xf32, #tpu.memory_space<vmem>>, vector<1x128x512xf32>,
    return
  }
  func.func @transform_0(%arg0: i32, %arg1: i32) -> (i32, i32, i32) {
    %c0_i32 = arith.constant 0 : i32
    %c0_i32_0 = arith.constant 0 : i32
    return %arg0, %c0_i32, %arg1 : i32, i32, i32
  }
  func.func @transform_1(%arg0: i32, %arg1: i32) -> (i32, i32) {
    %c0_i32 = arith.constant 0 : i32
    %c0_i32_0 = arith.constant 0 : i32
    %c0_i32_1 = arith.constant 0 : i32
    return %c0_i32, %c0_i32_0 : i32, i32
  }
  func.func @transform_2(%arg0: i32, %arg1: i32) -> (i32, i32) {
    %c0_i32 = arith.constant 0 : i32
    %c0_i32_0 = arith.constant 0 : i32
    %c0_i32_1 = arith.constant 0 : i32
    return %c0_i32, %c0_i32_0 : i32, i32
  }
  func.func @transform_3(%arg0: i32, %arg1: i32) -> (i32, i32) {
    %c0_i32 = arith.constant 0 : i32
    %c0_i32_0 = arith.constant 0 : i32
    %c0_i32_1 = arith.constant 0 : i32
    return %c0_i32, %c0_i32_0 : i32, i32
  }
  func.func @transform_4(%arg0: i32, %arg1: i32) -> (i32, i32, i32) {
    %c0_i32 = arith.constant 0 : i32
    %c0_i32_0 = arith.constant 0 : i32
    return %arg0, %c0_i32, %arg1 : i32, i32, i32
  }
}

</mosaic_0001>

<llo_original>
// kernel: tile.18
$region0: #{tile.18}
  #allocation0 [shape = 's32[1]{0}', space=sflag, size = 0x4, scoped, tag = 'scoped memory for tile.18']
  %s0 = inlined_call_operand.vmem [shape: f32[16], index: 0, kind: input, shape index: {}]
  %s1 = inlined_call_operand.vmem [shape: f32[8,16], index: 1, kind: output, shape index: {}]
  // Predicated region
  $region2: #{tile.18} parent=0 // pred_check
    _
  $region3: #{tile.18} parent=0 // pred_check_branch
    %3 = sbr.rel (0) target = $region5
  $region4: #{tile.18} parent=0 // pred_region
    _
  $region5: #{tile.18} parent=0 // pred_fallthru
    _
  %v4 = vld [vmem:[%s0] ss:$0 sm:$0xff]
  %5 = vst [vmem:[%s1] sm:$0xff] %v4

// kernel: tile.0
$region0: #{tile.0}
  %s0 = inlined_call_operand.vmem [shape: f32[8,16], index: 0, kind: input, shape index: {}]
  %s1 = inlined_call_operand.vmem [shape: f32[128,1], index: 1, kind: output, shape index: {}]
  %v2 = vld [vmem:[%s0] sm:$0xff]
  %vm3 = vcmask 7168
  %4 = vst.msk [vmem:[%s1] ss:$16 sm:$0x3] %vm3, %v2
  %5 = vst.msk [vmem:[%s1] ss:$16 sm:$0xc] %vm3, %v2
  %6 = vst.msk [vmem:[%s1] ss:$16 sm:$0x30] %vm3, %v2
  %7 = vst.msk [vmem:[%s1] ss:$16 sm:$0xc0] %vm3, %v2
  %v8 = vld [vmem:[%s0] sm:$0xff]
  %9 = vrot.lane.b32.xlu0 %v8, 127
  %v10 = vpop.permute.xlu0 %9
  %vm11 = vcmask 7168
  %s12 = scalar_lea.vmem %s1, 1
  %13 = vst.msk [vmem:[%s12] ss:$16 sm:$0x3] %vm11, %v10
  %s14 = scalar_lea.vmem %s1, 1
  %15 = vst.msk [vmem:[%s14] ss:$16 sm:$0xc] %vm11, %v10
  %s16 = scalar_lea.vmem %s1, 1
  %17 = vst.msk [vmem:[%s16] ss:$16 sm:$0x30] %vm11, %v10
  %s18 = scalar_lea.vmem %s1, 1
  %19 = vst.msk [vmem:[%s18] ss:$16 sm:$0xc0] %vm11, %v10
  %v20 = vld [vmem:[%s0] sm:$0xff]
  %21 = vrot.lane.b32.xlu0 %v20, 126
  %v22 = vpop.permute.xlu0 %21
  %vm23 = vcmask 7168
  %s24 = scalar_lea.vmem %s1, 2
  %25 = vst.msk [vmem:[%s24] ss:$16 sm:$0x3] %vm23, %v22
  %s26 = scalar_lea.vmem %s1, 2
  %27 = vst.msk [vmem:[%s26] ss:$16 sm:$0xc] %vm23, %v22
  %s28 = scalar_lea.vmem %s1, 2
  %29 = vst.msk [vmem:[%s28] ss:$16 sm:$0x30] %vm23, %v22
  %s30 = scalar_lea.vmem %s1, 2
  %31 = vst.msk [vmem:[%s30] ss:$16 sm:$0xc0] %vm23, %v22
  %v32 = vld [vmem:[%s0] sm:$0xff]
  %33 = vrot.lane.b32.xlu0 %v32, 125
  %v34 = vpop.permute.xlu0 %33
  %vm35 = vcmask 7168
  %s36 = scalar_lea.vmem %s1, 3
  %37 = vst.msk [vmem:[%s36] ss:$16 sm:$0x3] %vm35, %v34
  %s38 = scalar_lea.vmem %s1, 3
  %39 = vst.msk [vmem:[%s38] ss:$16 sm:$0xc] %vm35, %v34
  %s40 = scalar_lea.vmem %s1, 3
  %41 = vst.msk [vmem:[%s40] ss:$16 sm:$0x30] %vm35, %v34
  %s42 = scalar_lea.vmem %s1, 3
  %43 = vst.msk [vmem:[%s42] ss:$16 sm:$0xc0] %vm35, %v34
  %v44 = vld [vmem:[%s0] sm:$0xff]
  %45 = vrot.lane.b32.xlu0 %v44, 124
  %v46 = vpop.permute.xlu0 %45
  %vm47 = vcmask 7168
  %s48 = scalar_lea.vmem %s1, 4
  %49 = vst.msk [vmem:[%s48] ss:$16 sm:$0x3] %vm47, %v46
  %s50 = scalar_lea.vmem %s1, 4
  %51 = vst.msk [vmem:[%s50] ss:$16 sm:$0xc] %vm47, %v46
  %s52 = scalar_lea.vmem %s1, 4
  %53 = vst.msk [vmem:[%s52] ss:$16 sm:$0x30] %vm47, %v46
  %s54 = scalar_lea.vmem %s1, 4
  %55 = vst.msk [vmem:[%s54] ss:$16 sm:$0xc0] %vm47, %v46
  %v56 = vld [vmem:[%s0] sm:$0xff]
  %57 = vrot.lane.b32.xlu0 %v56, 123
  %v58 = vpop.permute.xlu0 %57
  %vm59 = vcmask 7168
  %s60 = scalar_lea.vmem %s1, 5
  %61 = vst.msk [vmem:[%s60] ss:$16 sm:$0x3] %vm59, %v58
  %s62 = scalar_lea.vmem %s1, 5
  %63 = vst.msk [vmem:[%s62] ss:$16 sm:$0xc] %vm59, %v58
  %s64 = scalar_lea.vmem %s1, 5
  %65 = vst.msk [vmem:[%s64] ss:$16 sm:$0x30] %vm59, %v58
  %s66 = scalar_lea.vmem %s1, 5
  %67 = vst.msk [vmem:[%s66] ss:$16 sm:$0xc0] %vm59, %v58
  %v68 = vld [vmem:[%s0] sm:$0xff]
  %69 = vrot.lane.b32.xlu0 %v68, 122
  %v70 = vpop.permute.xlu0 %69
  %vm71 = vcmask 7168
  %s72 = scalar_lea.vmem %s1, 6
  %73 = vst.msk [vmem:[%s72] ss:$16 sm:$0x3] %vm71, %v70
  %s74 = scalar_lea.vmem %s1, 6
  %75 = vst.msk [vmem:[%s74] ss:$16 sm:$0xc] %vm71, %v70
  %s76 = scalar_lea.vmem %s1, 6
  %77 = vst.msk [vmem:[%s76] ss:$16 sm:$0x30] %vm71, %v70
  %s78 = scalar_lea.vmem %s1, 6
  %79 = vst.msk [vmem:[%s78] ss:$16 sm:$0xc0] %vm71, %v70
  %v80 = vld [vmem:[%s0] sm:$0xff]
  %81 = vrot.lane.b32.xlu0 %v80, 121
  %v82 = vpop.permute.xlu0 %81
  %vm83 = vcmask 7168
  %s84 = scalar_lea.vmem %s1, 7
  %85 = vst.msk [vmem:[%s84] ss:$16 sm:$0x3] %vm83, %v82
  %s86 = scalar_lea.vmem %s1, 7
  %87 = vst.msk [vmem:[%s86] ss:$16 sm:$0xc] %vm83, %v82
  %s88 = scalar_lea.vmem %s1, 7
  %89 = vst.msk [vmem:[%s88] ss:$16 sm:$0x30] %vm83, %v82
  %s90 = scalar_lea.vmem %s1, 7
  %91 = vst.msk [vmem:[%s90] ss:$16 sm:$0xc0] %vm83, %v82
  %v92 = vld [vmem:[%s0] sm:$0xff]
  %93 = vrot.lane.b32.xlu0 %v92, 120
  %v94 = vpop.permute.xlu0 %93
  %vm95 = vcmask 7168
  %s96 = scalar_lea.vmem %s1, 8
  %97 = vst.msk [vmem:[%s96] ss:$16 sm:$0x3] %vm95, %v94
  %s98 = scalar_lea.vmem %s1, 8
  %99 = vst.msk [vmem:[%s98] ss:$16 sm:$0xc] %vm95, %v94
  %s100 = scalar_lea.vmem %s1, 8
  %101 = vst.msk [vmem:[%s100] ss:$16 sm:$0x30] %vm95, %v94
  %s102 = scalar_lea.vmem %s1, 8
  %103 = vst.msk [vmem:[%s102] ss:$16 sm:$0xc0] %vm95, %v94
  %v104 = vld [vmem:[%s0] sm:$0xff]
  %105 = vrot.lane.b32.xlu0 %v104, 119
  %v106 = vpop.permute.xlu0 %105
  %vm107 = vcmask 7168
  %s108 = scalar_lea.vmem %s1, 9
  %109 = vst.msk [vmem:[%s108] ss:$16 sm:$0x3] %vm107, %v106
  %s110 = scalar_lea.vmem %s1, 9
  %111 = vst.msk [vmem:[%s110] ss:$16 sm:$0xc] %vm107, %v106
  %s112 = scalar_lea.vmem %s1, 9
  %113 = vst.msk [vmem:[%s112] ss:$16 sm:$0x30] %vm107, %v106
  %s114 = scalar_lea.vmem %s1, 9
  %115 = vst.msk [vmem:[%s114] ss:$16 sm:$0xc0] %vm107, %v106
  %v116 = vld [vmem:[%s0] sm:$0xff]
  %117 = vrot.lane.b32.xlu0 %v116, 118
  %v118 = vpop.permute.xlu0 %117
  %vm119 = vcmask 7168
  %s120 = scalar_lea.vmem %s1, 10
  %121 = vst.msk [vmem:[%s120] ss:$16 sm:$0x3] %vm119, %v118
  %s122 = scalar_lea.vmem %s1, 10
  %123 = vst.msk [vmem:[%s122] ss:$16 sm:$0xc] %vm119, %v118
  %s124 = scalar_lea.vmem %s1, 10
  %125 = vst.msk [vmem:[%s124] ss:$16 sm:$0x30] %vm119, %v118
  %s126 = scalar_lea.vmem %s1, 10
  %127 = vst.msk [vmem:[%s126] ss:$16 sm:$0xc0] %vm119, %v118
  %v128 = vld [vmem:[%s0] sm:$0xff]
  %129 = vrot.lane.b32.xlu0 %v128, 117
  %v130 = vpop.permute.xlu0 %129
  %vm131 = vcmask 7168
  %s132 = scalar_lea.vmem %s1, 11
  %133 = vst.msk [vmem:[%s132] ss:$16 sm:$0x3] %vm131, %v130
  %s134 = scalar_lea.vmem %s1, 11
  %135 = vst.msk [vmem:[%s134] ss:$16 sm:$0xc] %vm131, %v130
  %s136 = scalar_lea.vmem %s1, 11
  %137 = vst.msk [vmem:[%s136] ss:$16 sm:$0x30] %vm131, %v130
  %s138 = scalar_lea.vmem %s1, 11
  %139 = vst.msk [vmem:[%s138] ss:$16 sm:$0xc0] %vm131, %v130
  %v140 = vld [vmem:[%s0] sm:$0xff]
  %141 = vrot.lane.b32.xlu0 %v140, 116
  %v142 = vpop.permute.xlu0 %141
  %vm143 = vcmask 7168
  %s144 = scalar_lea.vmem %s1, 12
  %145 = vst.msk [vmem:[%s144] ss:$16 sm:$0x3] %vm143, %v142
  %s146 = scalar_lea.vmem %s1, 12
  %147 = vst.msk [vmem:[%s146] ss:$16 sm:$0xc] %vm143, %v142
  %s148 = scalar_lea.vmem %s1, 12
  %149 = vst.msk [vmem:[%s148] ss:$16 sm:$0x30] %vm143, %v142
  %s150 = scalar_lea.vmem %s1, 12
  %151 = vst.msk [vmem:[%s150] ss:$16 sm:$0xc0] %vm143, %v142
  %v152 = vld [vmem:[%s0] sm:$0xff]
  %153 = vrot.lane.b32.xlu0 %v152, 115
  %v154 = vpop.permute.xlu0 %153
  %vm155 = vcmask 7168
  %s156 = scalar_lea.vmem %s1, 13
  %157 = vst.msk [vmem:[%s156] ss:$16 sm:$0x3] %vm155, %v154
  %s158 = scalar_lea.vmem %s1, 13
  %159 = vst.msk [vmem:[%s158] ss:$16 sm:$0xc] %vm155, %v154
  %s160 = scalar_lea.vmem %s1, 13
  %161 = vst.msk [vmem:[%s160] ss:$16 sm:$0x30] %vm155, %v154
  %s162 = scalar_lea.vmem %s1, 13
  %163 = vst.msk [vmem:[%s162] ss:$16 sm:$0xc0] %vm155, %v154
  %v164 = vld [vmem:[%s0] sm:$0xff]
  %165 = vrot.lane.b32.xlu0 %v164, 114
  %v166 = vpop.permute.xlu0 %165
  %vm167 = vcmask 7168
  %s168 = scalar_lea.vmem %s1, 14
  %169 = vst.msk [vmem:[%s168] ss:$16 sm:$0x3] %vm167, %v166
  %s170 = scalar_lea.vmem %s1, 14
  %171 = vst.msk [vmem:[%s170] ss:$16 sm:$0xc] %vm167, %v166
  %s172 = scalar_lea.vmem %s1, 14
  %173 = vst.msk [vmem:[%s172] ss:$16 sm:$0x30] %vm167, %v166
  %s174 = scalar_lea.vmem %s1, 14
  %175 = vst.msk [vmem:[%s174] ss:$16 sm:$0xc0] %vm167, %v166
  %v176 = vld [vmem:[%s0] sm:$0xff]
  %177 = vrot.lane.b32.xlu0 %v176, 113
  %v178 = vpop.permute.xlu0 %177
  %vm179 = vcmask 7168
  %s180 = scalar_lea.vmem %s1, 15
  %181 = vst.msk [vmem:[%s180] ss:$16 sm:$0x3] %vm179, %v178
  %s182 = scalar_lea.vmem %s1, 15
  %183 = vst.msk [vmem:[%s182] ss:$16 sm:$0xc] %vm179, %v178
  %s184 = scalar_lea.vmem %s1, 15
  %185 = vst.msk [vmem:[%s184] ss:$16 sm:$0x30] %vm179, %v178
  %s186 = scalar_lea.vmem %s1, 15
  %187 = vst.msk [vmem:[%s186] ss:$16 sm:$0xc0] %vm179, %v178

// kernel: _lambda_.1
$region0: #{_lambda_.1}
  #allocation0 [shape = 'u32[]', space=smem, size = 0x4, offset = 0x4, fixed_abs, tag = 'smem constant byte address 0x4 - core index']
  #allocation1 [shape = 'u32[144,128]{1,0:T(1,128)}', space=vmem, size = 0x12000, scoped, tag = 'internal scratch']
  %s0 = inlined_call_operand.vmem [shape: bf16[2,8,512], index: 0, kind: input, shape index: {}]
  %s1 = inlined_call_operand.hbm [shape: bf16[128,8], index: 1, kind: input, shape index: {}]
  %s2 = inlined_call_operand.vmem [shape: f32[128,1], index: 2, kind: input, shape index: {}]
  %s3 = inlined_call_operand.vmem [shape: f32[128,1], index: 3, kind: input, shape index: {}]
  %s4 = inlined_call_operand.vmem [shape: f32[2,128,512], index: 4, kind: output, shape index: {}]
  %s5 = sld [smem:[#allocation0]]
  $region53: #{_lambda_.1} parent=0
    _
  %s7 = ssub.s32 1, %s5
  %s8 = scalar_select 0, %s7, %s5
  $region1: #{_lambda_.1} parent=0
    #allocation2 [shape = 'u8[32768]{0}', space=vmem, size = 0x8000, scoped, tag = 'input window, operand 1, single buffered']
    #allocation3 [shape = 's32[2]{0}', space=sflag, size = 0x8, scoped, tag = 'scoped memory for _lambda_.1']
    %9 = vsyncpa [#allocation3], 0
    loop: start=0, step=1, limit=4
    $region2: #{_lambda_.1} parent=1 // loop_pre_header
      _
    $region3: #{_lambda_.1} parent=1 // loop_header
      %s11 = sphi 0, %s15
      %p12 = scmp.ge.s32.totalorder %s11, 4
      %s18 = sphi 0, %s30
      %s19 = sphi 0, %s26
      %s20 = sphi 0, %s18
      %s21 = sphi 0, %s19
      %s22 = sphi 0, %s20
      %s23 = sphi 0, %s21
      %s35 = sphi 0, %s37
      %s38 = sphi 0, %s35
      %s39 = sphi 0, %s38
      %s55 = sphi 0, %s39
      %s59 = sphi 0, %s59
      %s61 = sphi 0, %s59
      %s62 = sphi 0, %s61
      %s76 = sphi 0, %s62
      %s80 = sphi 0, %s80
      %s82 = sphi 0, %s80
      %s83 = sphi 0, %s82
      %s97 = sphi 0, %s83
      %s101 = sphi 0, %s101
      %s103 = sphi 0, %s101
      %s104 = sphi 0, %s103
      %s118 = sphi 0, %s104
      %s126 = sphi 0, %s128
      %s129 = sphi 0, %s126
      %s130 = sphi 0, %s129
      %s146 = sphi 0, %s130
    $region4: #{_lambda_.1} parent=1 // loop_header_branch
      %14 = sbr.rel (%p12) target = $region8
    $region5: #{_lambda_.1} parent=1 // loop_body
      %s16 = ssub.s32 %s11, 1
      %s17 = ssub.s32 %s11, 2
      %s24 = sadd.s32 1, %s19
      %p25 = scmp.ge.s32.totalorder %s24, 1
      %s26 = scalar_select %p25, 0, %s24
      %s27 = sadd.s32 1, %s18
      %s28 = scalar_select %p25, %s27, %s18
      %p29 = scmp.ge.s32.totalorder %s28, 2
      %s30 = scalar_select %p29, 0, %s28
      %s31 = ssub.s32 %s18, %s30
      %s32 = ssub.s32 %s19, %s26
      %s33 = sor.u32 %s31, %s32
      %p34 = scmp.eq.s32.totalorder %s33, 0
      %s36 = sadd.s32 %s35, 1
      %s37 = scalar_select %p34, %s35, %s36
      %p40 = pneg %p34
      %p41 = scmp.eq.s32.totalorder %s11, 1
      %p42 = por %p40, %p41
      %p43 = scmp.ne.s32.totalorder %s35, %s38
      %p44 = scmp.eq.s32.totalorder %s11, 0
      %p45 = por %p43, %p44
      %p46 = scmp.ne.s32.totalorder %s35, %s38
      %p47 = scmp.eq.s32.totalorder %s16, 1
      %p48 = por %p46, %p47
      %p49 = scmp.ne.s32.totalorder %s38, %s39
      %p50 = scmp.eq.s32.totalorder %s16, 0
      %p51 = por %p49, %p50
      %p52 = scmp.ne.s32.totalorder %s38, %s39
      %p53 = scmp.eq.s32.totalorder %s17, 1
      %p54 = por %p52, %p53
      %p56 = scmp.ne.s32.totalorder %s39, %s55
      %p57 = scmp.eq.s32.totalorder %s17, 0
      %p58 = por %p56, %p57
      %s60 = sadd.s32 %s59, 1
      %p63 = scmp.eq.s32.totalorder %s11, 1
      %p64 = scmp.ne.s32.totalorder %s59, %s61
      %p65 = scmp.eq.s32.totalorder %s11, 0
      %p66 = por %p64, %p65
      %p67 = scmp.ne.s32.totalorder %s59, %s61
      %p68 = scmp.eq.s32.totalorder %s16, 1
      %p69 = por %p67, %p68
      %p70 = scmp.ne.s32.totalorder %s61, %s62
      %p71 = scmp.eq.s32.totalorder %s16, 0
      %p72 = por %p70, %p71
      %p73 = scmp.ne.s32.totalorder %s61, %s62
      %p74 = scmp.eq.s32.totalorder %s17, 1
      %p75 = por %p73, %p74
      %p77 = scmp.ne.s32.totalorder %s62, %s76
      %p78 = scmp.eq.s32.totalorder %s17, 0
      %p79 = por %p77, %p78
      %s81 = sadd.s32 %s80, 1
      %p84 = scmp.eq.s32.totalorder %s11, 1
      %p85 = scmp.ne.s32.totalorder %s80, %s82
      %p86 = scmp.eq.s32.totalorder %s11, 0
      %p87 = por %p85, %p86
      %p88 = scmp.ne.s32.totalorder %s80, %s82
      %p89 = scmp.eq.s32.totalorder %s16, 1
      %p90 = por %p88, %p89
      %p91 = scmp.ne.s32.totalorder %s82, %s83
      %p92 = scmp.eq.s32.totalorder %s16, 0
      %p93 = por %p91, %p92
      %p94 = scmp.ne.s32.totalorder %s82, %s83
      %p95 = scmp.eq.s32.totalorder %s17, 1
      %p96 = por %p94, %p95
      %p98 = scmp.ne.s32.totalorder %s83, %s97
      %p99 = scmp.eq.s32.totalorder %s17, 0
      %p100 = por %p98, %p99
      %s102 = sadd.s32 %s101, 1
      %p105 = scmp.eq.s32.totalorder %s11, 1
      %p106 = scmp.ne.s32.totalorder %s101, %s103
      %p107 = scmp.eq.s32.totalorder %s11, 0
      %p108 = por %p106, %p107
      %p109 = scmp.ne.s32.totalorder %s101, %s103
      %p110 = scmp.eq.s32.totalorder %s16, 1
      %p111 = por %p109, %p110
      %p112 = scmp.ne.s32.totalorder %s103, %s104
      %p113 = scmp.eq.s32.totalorder %s16, 0
      %p114 = por %p112, %p113
      %p115 = scmp.ne.s32.totalorder %s103, %s104
      %p116 = scmp.eq.s32.totalorder %s17, 1
      %p117 = por %p115, %p116
      %p119 = scmp.ne.s32.totalorder %s104, %s118
      %p120 = scmp.eq.s32.totalorder %s17, 0
      %p121 = por %p119, %p120
      %s122 = ssub.s32 %s18, %s30
      %s123 = ssub.s32 %s19, %s26
      %s124 = sor.u32 %s122, %s123
      %p125 = scmp.eq.s32.totalorder %s124, 0
      %s127 = sadd.s32 %s126, 1
      %s128 = scalar_select %p125, %s126, %s127
      %p131 = pneg %p125
      %p132 = scmp.eq.s32.totalorder %s11, 1
      %p133 = por %p131, %p132
      %p134 = scmp.ne.s32.totalorder %s126, %s129
      %p135 = scmp.eq.s32.totalorder %s11, 0
      %p136 = por %p134, %p135
      %p137 = scmp.ne.s32.totalorder %s126, %s129
      %p138 = scmp.eq.s32.totalorder %s16, 1
      %p139 = por %p137, %p138
      %p140 = scmp.ne.s32.totalorder %s129, %s130
      %p141 = scmp.eq.s32.totalorder %s16, 0
      %p142 = por %p140, %p141
      %p143 = scmp.ne.s32.totalorder %s129, %s130
      %p144 = scmp.eq.s32.totalorder %s17, 1
      %p145 = por %p143, %p144
      %p147 = scmp.ne.s32.totalorder %s130, %s146
      %p148 = scmp.eq.s32.totalorder %s17, 0
      %p149 = por %p147, %p148
      %p150 = scmp.le.s32.totalorder 1, %s11
      %p151 = scmp.lt.s32.totalorder %s11, 3
      %p152 = pnand %p150, %p151
      %p153 = pneg %p152
      // Predicated region
      $region9: #{_lambda_.1} parent=5 // pred_check
        _
      $region10: #{_lambda_.1} parent=5 // pred_check_branch
        %155 = sbr.rel (%p152) target = $region12
      $region11: #{_lambda_.1} parent=5 // pred_region
        %s156 = ssub.s32 %s11, 1
        // Predicated region
        $region13: #{_lambda_.1} parent=11 // pred_check
          %p157 = pneg %p72
        $region14: #{_lambda_.1} parent=11 // pred_check_branch
          %159 = sbr.rel (%p157) target = $region16
        $region15: #{_lambda_.1} parent=11 // pred_region
          %s161 = ssub.s32 1024, 1024
          %162 = vsyncadd [#allocation3], %s161
          %s163 = sshll.u32 [#allocation2], 4
          %s164 = int_to_ptr.vmem [resolvable:$true] %s163
          %169 = dma.hbm_to_vmem [thread:$0]  %s1, 1024, %s164, [#allocation3], 64, 64, 4
        $region16: #{_lambda_.1} parent=11 // pred_fallthru
          _
        // Predicated region
        $region17: #{_lambda_.1} parent=11 // pred_check
          %p170 = pneg %p93
        $region18: #{_lambda_.1} parent=11 // pred_check_branch
          %172 = sbr.rel (%p170) target = $region20
        $region19: #{_lambda_.1} parent=11 // pred_region
          _
        $region20: #{_lambda_.1} parent=11 // pred_fallthru
          _
        // Predicated region
        $region21: #{_lambda_.1} parent=11 // pred_check
          %p173 = pneg %p114
        $region22: #{_lambda_.1} parent=11 // pred_check_branch
          %175 = sbr.rel (%p173) target = $region24
        $region23: #{_lambda_.1} parent=11 // pred_region
          _
        $region24: #{_lambda_.1} parent=11 // pred_fallthru
          _
      $region12: #{_lambda_.1} parent=5 // pred_fallthru
        _
      %p176 = scmp.lt.s32.totalorder %s11, 2
      // Predicated region
      $region25: #{_lambda_.1} parent=5 // pred_check
        %p177 = pneg %p176
      $region26: #{_lambda_.1} parent=5 // pred_check_branch
        %179 = sbr.rel (%p177) target = $region28
      $region27: #{_lambda_.1} parent=5 // pred_region
        // Predicated region
        $region29: #{_lambda_.1} parent=27 // pred_check
          %p180 = pneg %p45
        $region30: #{_lambda_.1} parent=27 // pred_check_branch
          %182 = sbr.rel (%p180) target = $region32
        $region31: #{_lambda_.1} parent=27 // pred_region
          %s183 = smul.u32 4, %s19
          %p184 = scmp.lt.s32.totalorder %s18, 1
          %s185 = scalar_select %p184, %s18, 1
          %p186 = scmp.lt.s32.totalorder %s183, 3
          %s187 = scalar_select %p186, %s183, 3
          %s188 = smul.addr %s185, 4
          %s189 = sadd.s32 %s187, %s188
          %s190 = smul.addr %s189, 4
          %s191 = scalar_lea.vmem %s0, %s190
          %s192 = smul.u32 4, %s19
        $region32: #{_lambda_.1} parent=27 // pred_fallthru
          _
      $region28: #{_lambda_.1} parent=5 // pred_fallthru
        _
      %p193 = scmp.le.s32.totalorder 1, %s11
      %p194 = scmp.lt.s32.totalorder %s11, 3
      %p195 = pnand %p193, %p194
      %p196 = pneg %p195
      // Predicated region
      $region33: #{_lambda_.1} parent=5 // pred_check
        _
      $region34: #{_lambda_.1} parent=5 // pred_check_branch
        %198 = sbr.rel (%p195) target = $region36
      $region35: #{_lambda_.1} parent=5 // pred_region
        %s199 = ssub.s32 %s11, 1
        // Predicated region
        $region37: #{_lambda_.1} parent=35 // pred_check
          %p200 = pneg %p72
        $region38: #{_lambda_.1} parent=35 // pred_check_branch
          %202 = sbr.rel (%p200) target = $region40
        $region39: #{_lambda_.1} parent=35 // pred_region
          %203 = dma.done [#allocation3], 1024
        $region40: #{_lambda_.1} parent=35 // pred_fallthru
          _
        %s204 = smul.u32 4, %s21
        %p205 = scmp.lt.s32.totalorder %s20, 1
        %s206 = scalar_select %p205, %s20, 1
        %p207 = scmp.lt.s32.totalorder %s204, 3
        %s208 = scalar_select %p207, %s204, 3
        %s209 = smul.addr %s206, 4
        %s210 = sadd.s32 %s208, %s209
        %s211 = smul.addr %s210, 4
        %s212 = scalar_lea.vmem %s0, %s211
        %p213 = pneg %p51
        %p214 = pneg %p48
        %p215 = pneg %p72
        %p216 = pneg %p69
        %p217 = pneg %p93
        %p218 = pneg %p90
        %p219 = pneg %p114
        %p220 = pneg %p111
        %p221 = pneg %p142
        %p222 = pneg %p139
        %s223 = smul.u32 4, %s21
        %p224 = scmp.lt.s32.totalorder %s20, 1
        %s225 = scalar_select %p224, %s20, 1
        %p226 = scmp.lt.s32.totalorder %s223, 3
        %s227 = scalar_select %p226, %s223, 3
        %s228 = smul.addr %s225, 64
        %s229 = sadd.s32 %s227, %s228
        %s230 = smul.addr %s229, 8
        %s231 = scalar_lea.vmem %s4, %s230
        %s232 = smul.u32 4, %s21
        %p233 = scmp.lt.s32.totalorder %s20, 1
        %s234 = scalar_select %p233, %s20, 1
        %p235 = scmp.lt.s32.totalorder %s232, 3
        %s236 = scalar_select %p235, %s232, 3
        %s237 = smul.addr %s234, 4
        %s238 = sadd.s32 %s236, %s237
        %s239 = smul.addr %s238, 4
        %s240 = scalar_lea.vmem %s0, %s239
        %s241 = smul.u32 4, %s21
        %s242 = smul.u32 4, %s21
        %p243 = scmp.lt.s32.totalorder %s20, 1
        %s244 = scalar_select %p243, %s20, 1
        %p245 = scmp.lt.s32.totalorder %s242, 3
        %s246 = scalar_select %p245, %s242, 3
        %s247 = smul.addr %s244, 64
        %s248 = sadd.s32 %s246, %s247
        %s249 = smul.addr %s248, 8
        %s250 = scalar_lea.vmem %s4, %s249
        %s251 = smul.u32 4, %s21
        %v253 = vld [vmem:[%s240] sm:$0xff]
        %v254 = vld [vmem:[%s240 + $0x8] sm:$0xff]
        %v255 = vld [vmem:[#allocation2] sm:$0xf]
        %v256 = vld [vmem:[#allocation2 + $0x4] sm:$0xf]
        %v257 = vld [vmem:[#allocation2 + $0x8] sm:$0xf]
        %v258 = vld [vmem:[#allocation2 + $0xc] sm:$0xf]
        %v259 = vld [vmem:[#allocation2 + $0x10] sm:$0xf]
        %v260 = vld [vmem:[#allocation2 + $0x14] sm:$0xf]
        %v261 = vld [vmem:[#allocation2 + $0x18] sm:$0xf]
        %v262 = vld [vmem:[#allocation2 + $0x1c] sm:$0xf]
        %v263 = vld [vmem:[#allocation2 + $0x20] sm:$0xf]
        %v264 = vld [vmem:[#allocation2 + $0x24] sm:$0xf]
        %v265 = vld [vmem:[#allocation2 + $0x28] sm:$0xf]
        %v266 = vld [vmem:[#allocation2 + $0x2c] sm:$0xf]
        %v267 = vld [vmem:[#allocation2 + $0x30] sm:$0xf]
        %v268 = vld [vmem:[#allocation2 + $0x34] sm:$0xf]
        %v269 = vld [vmem:[#allocation2 + $0x38] sm:$0xf]
        %v270 = vld [vmem:[#allocation2 + $0x3c] sm:$0xf]
        %v287 = vunpack.c.l.b16 %v255
        %v288 = vunpack.c.l.b16 %v256
        %v289 = vunpack.c.l.b16 %v257
        %v290 = vunpack.c.l.b16 %v258
        %v291 = vunpack.c.l.b16 %v259
        %v292 = vunpack.c.l.b16 %v260
        %v293 = vunpack.c.l.b16 %v261
        %v294 = vunpack.c.l.b16 %v262
        %v295 = vunpack.c.l.b16 %v263
        %v296 = vunpack.c.l.b16 %v264
        %v297 = vunpack.c.l.b16 %v265
        %v298 = vunpack.c.l.b16 %v266
        %v299 = vunpack.c.l.b16 %v267
        %v300 = vunpack.c.l.b16 %v268
        %v301 = vunpack.c.l.b16 %v269
        %v302 = vunpack.c.l.b16 %v270
        %v303 = vpack.c.b16 %v288, %v287
        %v304 = vpack.c.b16 %v290, %v289
        %v305 = vpack.c.b16 %v292, %v291
        %v306 = vpack.c.b16 %v294, %v293
        %v307 = vpack.c.b16 %v296, %v295
        %v308 = vpack.c.b16 %v298, %v297
        %v309 = vpack.c.b16 %v300, %v299
        %v310 = vpack.c.b16 %v302, %v301
        %v313 = vunpack.c.l.b16 %v253
        %v314 = vunpack.c.h.b16 %v253
        %v315 = vunpack.c.l.b16 %v254
        %v316 = vunpack.c.h.b16 %v254
        %v317 = vpack.c.b16 %v313, %v313
        %v318 = vpack.c.b16 %v314, %v314
        %v319 = vpack.c.b16 %v315, %v315
        %v320 = vpack.c.b16 %v316, %v316
        %vm321 = vcmask 64512
        %v323 = vsel %vm321, %v303, 0
        %v326 = vsel %vm321, %v304, 0
        %v329 = vsel %vm321, %v305, 0
        %v332 = vsel %vm321, %v306, 0
        %v335 = vsel %vm321, %v307, 0
        %v338 = vsel %vm321, %v308, 0
        %v341 = vsel %vm321, %v309, 0
        %v344 = vsel %vm321, %v310, 0
        %vm346 = vcmask 1043456
        %v348 = vsel %vm346, %v317, 0
        %v351 = vsel %vm346, %v318, 0
        %v354 = vsel %vm346, %v319, 0
        %v357 = vsel %vm346, %v320, 0
        %359 = vmatprep.subr.bf16.mxu0 %v351
        %360 = vmatpush1.bf16.msra.mxu0 %v348
        %361 = vmatprep.subr.bf16.mxu0 0
        %362 = vmatpush1.bf16.msra.mxu0 0
        %363 = vmatprep.subr.bf16.mxu0 0
        %364 = vmatpush1.bf16.msra.mxu0 0
        %365 = vmatprep.subr.bf16.mxu0 0
        %366 = vmatpush1.bf16.msra.mxu0 0
        %367 = vmatprep.subr.bf16.mxu0 0
        %368 = vmatpush1.bf16.msra.mxu0 0
        %369 = vmatprep.subr.bf16.mxu0 0
        %370 = vmatpush1.bf16.msra.mxu0 0
        %371 = vmatprep.subr.bf16.mxu0 0
        %372 = vmatpush1.bf16.msra.mxu0 0
        %373 = vmatprep.subr.bf16.mxu0 0
        %374 = vmatpush1.bf16.msra.mxu0 0
        %375 = vmatprep.subr.bf16.mxu0 0
        %376 = vmatpush1.bf16.msra.mxu0 0
        %377 = vmatprep.subr.bf16.mxu0 0
        %378 = vmatpush1.bf16.msra.mxu0 0
        %379 = vmatprep.subr.bf16.mxu0 0
        %380 = vmatpush1.bf16.msra.mxu0 0
        %381 = vmatprep.subr.bf16.mxu0 0
        %382 = vmatpush1.bf16.msra.mxu0 0
        %383 = vmatprep.subr.bf16.mxu0 0
        %384 = vmatpush1.bf16.msra.mxu0 0
        %385 = vmatprep.subr.bf16.mxu0 0
        %386 = vmatpush1.bf16.msra.mxu0 0
        %387 = vmatprep.subr.bf16.mxu0 0
        %388 = vmatpush1.bf16.msra.mxu0 0
        %389 = vmatprep.subr.bf16.mxu0 0
        %390 = vmatpush1.bf16.msra.mxu0 0
        %391 = vmatprep.mubr.bf16.mxu0 0
        %392 = vmatmul.mubr.bf16.gmra.mrb[0].mxu0 %v323
        %v393 = vpop.f32.mrb[0].mxu0
        %v394 = vadd.f32 0.0, %v393
        %v395 = vpop.f32.mrb[0].mxu0
        %v396 = vadd.f32 0.0, %v395
        %v397 = vpop.f32.mrb[0].mxu0
        %v398 = vadd.f32 0.0, %v397
        %v399 = vpop.f32.mrb[0].mxu0
        %v400 = vadd.f32 0.0, %v399
        %401 = vmatprep.mubr.bf16.mxu0 0
        %402 = vmatmul.mubr.bf16.gmra.mrb[0].mxu0 %v326
        %v403 = vpop.f32.mrb[0].mxu0
        %v404 = vadd.f32 0.0, %v403
        %v405 = vpop.f32.mrb[0].mxu0
        %v406 = vadd.f32 0.0, %v405
        %v407 = vpop.f32.mrb[0].mxu0
        %v408 = vadd.f32 0.0, %v407
        %v409 = vpop.f32.mrb[0].mxu0
        %v410 = vadd.f32 0.0, %v409
        %411 = vmatprep.mubr.bf16.mxu0 0
        %412 = vmatmul.mubr.bf16.gmra.mrb[0].mxu0 %v329
        %v413 = vpop.f32.mrb[0].mxu0
        %v414 = vadd.f32 0.0, %v413
        %v415 = vpop.f32.mrb[0].mxu0
        %v416 = vadd.f32 0.0, %v415
        %v417 = vpop.f32.mrb[0].mxu0
        %v418 = vadd.f32 0.0, %v417
        %v419 = vpop.f32.mrb[0].mxu0
        %v420 = vadd.f32 0.0, %v419
        %421 = vmatprep.mubr.bf16.mxu0 0
        %422 = vmatmul.mubr.bf16.gmra.mrb[0].mxu0 %v332
        %v423 = vpop.f32.mrb[0].mxu0
        %v424 = vadd.f32 0.0, %v423
        %v425 = vpop.f32.mrb[0].mxu0
        %v426 = vadd.f32 0.0, %v425
        %v427 = vpop.f32.mrb[0].mxu0
        %v428 = vadd.f32 0.0, %v427
        %v429 = vpop.f32.mrb[0].mxu0
        %v430 = vadd.f32 0.0, %v429
        %431 = vmatprep.mubr.bf16.mxu0 0
        %432 = vmatmul.mubr.bf16.gmra.mrb[0].mxu0 %v335
        %v433 = vpop.f32.mrb[0].mxu0
        %v434 = vadd.f32 0.0, %v433
        %v435 = vpop.f32.mrb[0].mxu0
        %v436 = vadd.f32 0.0, %v435
        %v437 = vpop.f32.mrb[0].mxu0
        %v438 = vadd.f32 0.0, %v437
        %v439 = vpop.f32.mrb[0].mxu0
        %v440 = vadd.f32 0.0, %v439
        %441 = vmatprep.mubr.bf16.mxu0 0
        %442 = vmatmul.mubr.bf16.gmra.mrb[0].mxu0 %v338
        %v443 = vpop.f32.mrb[0].mxu0
        %v444 = vadd.f32 0.0, %v443
        %v445 = vpop.f32.mrb[0].mxu0
        %v446 = vadd.f32 0.0, %v445
        %v447 = vpop.f32.mrb[0].mxu0
        %v448 = vadd.f32 0.0, %v447
        %v449 = vpop.f32.mrb[0].mxu0
        %v450 = vadd.f32 0.0, %v449
        %451 = vmatprep.mubr.bf16.mxu0 0
        %452 = vmatmul.mubr.bf16.gmra.mrb[0].mxu0 %v341
        %v453 = vpop.f32.mrb[0].mxu0
        %v454 = vadd.f32 0.0, %v453
        %v455 = vpop.f32.mrb[0].mxu0
        %v456 = vadd.f32 0.0, %v455
        %v457 = vpop.f32.mrb[0].mxu0
        %v458 = vadd.f32 0.0, %v457
        %v459 = vpop.f32.mrb[0].mxu0
        %v460 = vadd.f32 0.0, %v459
        %461 = vmatprep.mubr.bf16.mxu0 0
        %462 = vmatmul.mubr.bf16.gmra.mrb[0].mxu0 %v344
        %v463 = vpop.f32.mrb[0].mxu0
        %v464 = vadd.f32 0.0, %v463
        %v465 = vpop.f32.mrb[0].mxu0
        %v466 = vadd.f32 0.0, %v465
        %v467 = vpop.f32.mrb[0].mxu0
        %v468 = vadd.f32 0.0, %v467
        %v469 = vpop.f32.mrb[0].mxu0
        %v470 = vadd.f32 0.0, %v469
        %471 = vdwg.mxu0
        %472 = vmatprep.subr.bf16.mxu0 %v357
        %473 = vmatpush1.bf16.msra.mxu0 %v354
        %474 = vmatprep.subr.bf16.mxu0 0
        %475 = vmatpush1.bf16.msra.mxu0 0
        %476 = vmatprep.subr.bf16.mxu0 0
        %477 = vmatpush1.bf16.msra.mxu0 0
        %478 = vmatprep.subr.bf16.mxu0 0
        %479 = vmatpush1.bf16.msra.mxu0 0
        %480 = vmatprep.subr.bf16.mxu0 0
        %481 = vmatpush1.bf16.msra.mxu0 0
        %482 = vmatprep.subr.bf16.mxu0 0
        %483 = vmatpush1.bf16.msra.mxu0 0
        %484 = vmatprep.subr.bf16.mxu0 0
        %485 = vmatpush1.bf16.msra.mxu0 0
        %486 = vmatprep.subr.bf16.mxu0 0
        %487 = vmatpush1.bf16.msra.mxu0 0
        %488 = vmatprep.subr.bf16.mxu0 0
        %489 = vmatpush1.bf16.msra.mxu0 0
        %490 = vmatprep.subr.bf16.mxu0 0
        %491 = vmatpush1.bf16.msra.mxu0 0
        %492 = vmatprep.subr.bf16.mxu0 0
        %493 = vmatpush1.bf16.msra.mxu0 0
        %494 = vmatprep.subr.bf16.mxu0 0
        %495 = vmatpush1.bf16.msra.mxu0 0
        %496 = vmatprep.subr.bf16.mxu0 0
        %497 = vmatpush1.bf16.msra.mxu0 0
        %498 = vmatprep.subr.bf16.mxu0 0
        %499 = vmatpush1.bf16.msra.mxu0 0
        %500 = vmatprep.subr.bf16.mxu0 0
        %501 = vmatpush1.bf16.msra.mxu0 0
        %502 = vmatprep.subr.bf16.mxu0 0
        %503 = vmatpush1.bf16.msra.mxu0 0
        %504 = vmatprep.mubr.bf16.mxu0 0
        %505 = vmatmul.mubr.bf16.gmra.mrb[0].mxu0 %v323
        %v506 = vpop.f32.mrb[0].mxu0
        %v507 = vadd.f32 0.0, %v506
        %v508 = vpop.f32.mrb[0].mxu0
        %v509 = vadd.f32 0.0, %v508
        %v510 = vpop.f32.mrb[0].mxu0
        %v511 = vadd.f32 0.0, %v510
        %v512 = vpop.f32.mrb[0].mxu0
        %v513 = vadd.f32 0.0, %v512
        %514 = vmatprep.mubr.bf16.mxu0 0
        %515 = vmatmul.mubr.bf16.gmra.mrb[0].mxu0 %v326
        %v516 = vpop.f32.mrb[0].mxu0
        %v517 = vadd.f32 0.0, %v516
        %v518 = vpop.f32.mrb[0].mxu0
        %v519 = vadd.f32 0.0, %v518
        %v520 = vpop.f32.mrb[0].mxu0
        %v521 = vadd.f32 0.0, %v520
        %v522 = vpop.f32.mrb[0].mxu0
        %v523 = vadd.f32 0.0, %v522
        %524 = vmatprep.mubr.bf16.mxu0 0
        %525 = vmatmul.mubr.bf16.gmra.mrb[0].mxu0 %v329
        %v526 = vpop.f32.mrb[0].mxu0
        %v527 = vadd.f32 0.0, %v526
        %v528 = vpop.f32.mrb[0].mxu0
        %v529 = vadd.f32 0.0, %v528
        %v530 = vpop.f32.mrb[0].mxu0
        %v531 = vadd.f32 0.0, %v530
        %v532 = vpop.f32.mrb[0].mxu0
        %v533 = vadd.f32 0.0, %v532
        %534 = vmatprep.mubr.bf16.mxu0 0
        %535 = vmatmul.mubr.bf16.gmra.mrb[0].mxu0 %v332
        %v536 = vpop.f32.mrb[0].mxu0
        %v537 = vadd.f32 0.0, %v536
        %v538 = vpop.f32.mrb[0].mxu0
        %v539 = vadd.f32 0.0, %v538
        %v540 = vpop.f32.mrb[0].mxu0
        %v541 = vadd.f32 0.0, %v540
        %v542 = vpop.f32.mrb[0].mxu0
        %v543 = vadd.f32 0.0, %v542
        %544 = vmatprep.mubr.bf16.mxu0 0
        %545 = vmatmul.mubr.bf16.gmra.mrb[0].mxu0 %v335
        %v546 = vpop.f32.mrb[0].mxu0
        %v547 = vadd.f32 0.0, %v546
        %v548 = vpop.f32.mrb[0].mxu0
        %v549 = vadd.f32 0.0, %v548
        %v550 = vpop.f32.mrb[0].mxu0
        %v551 = vadd.f32 0.0, %v550
        %v552 = vpop.f32.mrb[0].mxu0
        %v553 = vadd.f32 0.0, %v552
        %554 = vmatprep.mubr.bf16.mxu0 0
        %555 = vmatmul.mubr.bf16.gmra.mrb[0].mxu0 %v338
        %v556 = vpop.f32.mrb[0].mxu0
        %v557 = vadd.f32 0.0, %v556
        %v558 = vpop.f32.mrb[0].mxu0
        %v559 = vadd.f32 0.0, %v558
        %v560 = vpop.f32.mrb[0].mxu0
        %v561 = vadd.f32 0.0, %v560
        %v562 = vpop.f32.mrb[0].mxu0
        %v563 = vadd.f32 0.0, %v562
        %564 = vmatprep.mubr.bf16.mxu0 0
        %565 = vmatmul.mubr.bf16.gmra.mrb[0].mxu0 %v341
        %v566 = vpop.f32.mrb[0].mxu0
        %v567 = vadd.f32 0.0, %v566
        %v568 = vpop.f32.mrb[0].mxu0
        %v569 = vadd.f32 0.0, %v568
        %v570 = vpop.f32.mrb[0].mxu0
        %v571 = vadd.f32 0.0, %v570
        %v572 = vpop.f32.mrb[0].mxu0
        %v573 = vadd.f32 0.0, %v572
        %574 = vmatprep.mubr.bf16.mxu0 0
        %575 = vmatmul.mubr.bf16.gmra.mrb[0].mxu0 %v344
        %v576 = vpop.f32.mrb[0].mxu0
        %v577 = vadd.f32 0.0, %v576
        %v578 = vpop.f32.mrb[0].mxu0
        %v579 = vadd.f32 0.0, %v578
        %v580 = vpop.f32.mrb[0].mxu0
        %v581 = vadd.f32 0.0, %v580
        %v582 = vpop.f32.mrb[0].mxu0
        %v583 = vadd.f32 0.0, %v582
        %584 = vdwg.mxu0
        %v585 = vld [vmem:[%s2] sm:$0xff]
        %v586 = vld [vmem:[%s2 + $0x8] sm:$0xff]
        %v587 = vld [vmem:[%s2 + $0x10] sm:$0xff]
        %v588 = vld [vmem:[%s2 + $0x18] sm:$0xff]
        %v589 = vld [vmem:[%s2 + $0x20] sm:$0xff]
        %v590 = vld [vmem:[%s2 + $0x28] sm:$0xff]
        %v591 = vld [vmem:[%s2 + $0x30] sm:$0xff]
        %v592 = vld [vmem:[%s2 + $0x38] sm:$0xff]
        %v593 = vld [vmem:[%s2 + $0x40] sm:$0xff]
        %v594 = vld [vmem:[%s2 + $0x48] sm:$0xff]
        %v595 = vld [vmem:[%s2 + $0x50] sm:$0xff]
        %v596 = vld [vmem:[%s2 + $0x58] sm:$0xff]
        %v597 = vld [vmem:[%s2 + $0x60] sm:$0xff]
        %v598 = vld [vmem:[%s2 + $0x68] sm:$0xff]
        %v599 = vld [vmem:[%s2 + $0x70] sm:$0xff]
        %v600 = vld [vmem:[%s2 + $0x78] sm:$0xff]
        %602 = vset.pattern.permute.xlu0 0
        %603 = vperm.xlu0 %602, %v585
        %v604 = vpop.permute.xlu0 %603
        %607 = vset.pattern.permute.xlu0 0
        %608 = vperm.xlu0 %607, %v586
        %v609 = vpop.permute.xlu0 %608
        %612 = vset.pattern.permute.xlu0 0
        %613 = vperm.xlu0 %612, %v587
        %v614 = vpop.permute.xlu0 %613
        %617 = vset.pattern.permute.xlu0 0
        %618 = vperm.xlu0 %617, %v588
        %v619 = vpop.permute.xlu0 %618
        %622 = vset.pattern.permute.xlu0 0
        %623 = vperm.xlu0 %622, %v589
        %v624 = vpop.permute.xlu0 %623
        %627 = vset.pattern.permute.xlu0 0
        %628 = vperm.xlu0 %627, %v590
        %v629 = vpop.permute.xlu0 %628
        %632 = vset.pattern.permute.xlu0 0
        %633 = vperm.xlu0 %632, %v591
        %v634 = vpop.permute.xlu0 %633
        %637 = vset.pattern.permute.xlu0 0
        %638 = vperm.xlu0 %637, %v592
        %v639 = vpop.permute.xlu0 %638
        %642 = vset.pattern.permute.xlu0 0
        %643 = vperm.xlu0 %642, %v593
        %v644 = vpop.permute.xlu0 %643
        %647 = vset.pattern.permute.xlu0 0
        %648 = vperm.xlu0 %647, %v594
        %v649 = vpop.permute.xlu0 %648
        %652 = vset.pattern.permute.xlu0 0
        %653 = vperm.xlu0 %652, %v595
        %v654 = vpop.permute.xlu0 %653
        %657 = vset.pattern.permute.xlu0 0
        %658 = vperm.xlu0 %657, %v596
        %v659 = vpop.permute.xlu0 %658
        %662 = vset.pattern.permute.xlu0 0
        %663 = vperm.xlu0 %662, %v597
        %v664 = vpop.permute.xlu0 %663
        %667 = vset.pattern.permute.xlu0 0
        %668 = vperm.xlu0 %667, %v598
        %v669 = vpop.permute.xlu0 %668
        %672 = vset.pattern.permute.xlu0 0
        %673 = vperm.xlu0 %672, %v599
        %v674 = vpop.permute.xlu0 %673
        %677 = vset.pattern.permute.xlu0 0
        %678 = vperm.xlu0 %677, %v600
        %v679 = vpop.permute.xlu0 %678
        %v681 = vmul.f32 %v394, %v604
        %v682 = vmul.f32 %v396, %v604
        %v683 = vmul.f32 %v507, %v604
        %v684 = vmul.f32 %v509, %v604
        %v685 = vmul.f32 %v398, %v609
        %v686 = vmul.f32 %v400, %v609
        %v687 = vmul.f32 %v511, %v609
        %v688 = vmul.f32 %v513, %v609
        %v689 = vmul.f32 %v404, %v614
        %v690 = vmul.f32 %v406, %v614
        %v691 = vmul.f32 %v517, %v614
        %v692 = vmul.f32 %v519, %v614
        %v693 = vmul.f32 %v408, %v619
        %v694 = vmul.f32 %v410, %v619
        %v695 = vmul.f32 %v521, %v619
        %v696 = vmul.f32 %v523, %v619
        %v697 = vmul.f32 %v414, %v624
        %v698 = vmul.f32 %v416, %v624
        %v699 = vmul.f32 %v527, %v624
        %v700 = vmul.f32 %v529, %v624
        %v701 = vmul.f32 %v418, %v629
        %v702 = vmul.f32 %v420, %v629
        %v703 = vmul.f32 %v531, %v629
        %v704 = vmul.f32 %v533, %v629
        %v705 = vmul.f32 %v424, %v634
        %v706 = vmul.f32 %v426, %v634
        %v707 = vmul.f32 %v537, %v634
        %v708 = vmul.f32 %v539, %v634
        %v709 = vmul.f32 %v428, %v639
        %v710 = vmul.f32 %v430, %v639
        %v711 = vmul.f32 %v541, %v639
        %v712 = vmul.f32 %v543, %v639
        %v713 = vmul.f32 %v434, %v644
        %v714 = vmul.f32 %v436, %v644
        %v715 = vmul.f32 %v547, %v644
        %v716 = vmul.f32 %v549, %v644
        %v717 = vmul.f32 %v438, %v649
        %v718 = vmul.f32 %v440, %v649
        %v719 = vmul.f32 %v551, %v649
        %v720 = vmul.f32 %v553, %v649
        %v721 = vmul.f32 %v444, %v654
        %v722 = vmul.f32 %v446, %v654
        %v723 = vmul.f32 %v557, %v654
        %v724 = vmul.f32 %v559, %v654
        %v725 = vmul.f32 %v448, %v659
        %v726 = vmul.f32 %v450, %v659
        %v727 = vmul.f32 %v561, %v659
        %v728 = vmul.f32 %v563, %v659
        %v729 = vmul.f32 %v454, %v664
        %v730 = vmul.f32 %v456, %v664
        %v731 = vmul.f32 %v567, %v664
        %v732 = vmul.f32 %v569, %v664
        %v733 = vmul.f32 %v458, %v669
        %v734 = vmul.f32 %v460, %v669
        %v735 = vmul.f32 %v571, %v669
        %v736 = vmul.f32 %v573, %v669
        %v737 = vmul.f32 %v464, %v674
        %v738 = vmul.f32 %v466, %v674
        %v739 = vmul.f32 %v577, %v674
        %v740 = vmul.f32 %v579, %v674
        %v741 = vmul.f32 %v468, %v679
        %v742 = vmul.f32 %v470, %v679
        %v743 = vmul.f32 %v581, %v679
        %v744 = vmul.f32 %v583, %v679
        %v745 = vld [vmem:[%s3] sm:$0xff]
        %v746 = vld [vmem:[%s3 + $0x8] sm:$0xff]
        %v747 = vld [vmem:[%s3 + $0x10] sm:$0xff]
        %v748 = vld [vmem:[%s3 + $0x18] sm:$0xff]
        %v749 = vld [vmem:[%s3 + $0x20] sm:$0xff]
        %v750 = vld [vmem:[%s3 + $0x28] sm:$0xff]
        %v751 = vld [vmem:[%s3 + $0x30] sm:$0xff]
        %v752 = vld [vmem:[%s3 + $0x38] sm:$0xff]
        %v753 = vld [vmem:[%s3 + $0x40] sm:$0xff]
        %v754 = vld [vmem:[%s3 + $0x48] sm:$0xff]
        %v755 = vld [vmem:[%s3 + $0x50] sm:$0xff]
        %v756 = vld [vmem:[%s3 + $0x58] sm:$0xff]
        %v757 = vld [vmem:[%s3 + $0x60] sm:$0xff]
        %v758 = vld [vmem:[%s3 + $0x68] sm:$0xff]
        %v759 = vld [vmem:[%s3 + $0x70] sm:$0xff]
        %v760 = vld [vmem:[%s3 + $0x78] sm:$0xff]
        %762 = vset.pattern.permute.xlu0 0
        %763 = vperm.xlu0 %762, %v745
        %v764 = vpop.permute.xlu0 %763
        %767 = vset.pattern.permute.xlu0 0
        %768 = vperm.xlu0 %767, %v746
        %v769 = vpop.permute.xlu0 %768
        %772 = vset.pattern.permute.xlu0 0
        %773 = vperm.xlu0 %772, %v747
        %v774 = vpop.permute.xlu0 %773
        %777 = vset.pattern.permute.xlu0 0
        %778 = vperm.xlu0 %777, %v748
        %v779 = vpop.permute.xlu0 %778
        %782 = vset.pattern.permute.xlu0 0
        %783 = vperm.xlu0 %782, %v749
        %v784 = vpop.permute.xlu0 %783
        %787 = vset.pattern.permute.xlu0 0
        %788 = vperm.xlu0 %787, %v750
        %v789 = vpop.permute.xlu0 %788
        %792 = vset.pattern.permute.xlu0 0
        %793 = vperm.xlu0 %792, %v751
        %v794 = vpop.permute.xlu0 %793
        %797 = vset.pattern.permute.xlu0 0
        %798 = vperm.xlu0 %797, %v752
        %v799 = vpop.permute.xlu0 %798
        %802 = vset.pattern.permute.xlu0 0
        %803 = vperm.xlu0 %802, %v753
        %v804 = vpop.permute.xlu0 %803
        %807 = vset.pattern.permute.xlu0 0
        %808 = vperm.xlu0 %807, %v754
        %v809 = vpop.permute.xlu0 %808
        %812 = vset.pattern.permute.xlu0 0
        %813 = vperm.xlu0 %812, %v755
        %v814 = vpop.permute.xlu0 %813
        %817 = vset.pattern.permute.xlu0 0
        %818 = vperm.xlu0 %817, %v756
        %v819 = vpop.permute.xlu0 %818
        %822 = vset.pattern.permute.xlu0 0
        %823 = vperm.xlu0 %822, %v757
        %v824 = vpop.permute.xlu0 %823
        %827 = vset.pattern.permute.xlu0 0
        %828 = vperm.xlu0 %827, %v758
        %v829 = vpop.permute.xlu0 %828
        %832 = vset.pattern.permute.xlu0 0
        %833 = vperm.xlu0 %832, %v759
        %v834 = vpop.permute.xlu0 %833
        %837 = vset.pattern.permute.xlu0 0
        %838 = vperm.xlu0 %837, %v760
        %v839 = vpop.permute.xlu0 %838
        %v841 = vadd.f32 %v681, %v764
        %v842 = vadd.f32 %v682, %v764
        %v843 = vadd.f32 %v683, %v764
        %v844 = vadd.f32 %v684, %v764
        %v845 = vadd.f32 %v685, %v769
        %v846 = vadd.f32 %v686, %v769
        %v847 = vadd.f32 %v687, %v769
        %v848 = vadd.f32 %v688, %v769
        %v849 = vadd.f32 %v689, %v774
        %v850 = vadd.f32 %v690, %v774
        %v851 = vadd.f32 %v691, %v774
        %v852 = vadd.f32 %v692, %v774
        %v853 = vadd.f32 %v693, %v779
        %v854 = vadd.f32 %v694, %v779
        %v855 = vadd.f32 %v695, %v779
        %v856 = vadd.f32 %v696, %v779
        %v857 = vadd.f32 %v697, %v784
        %v858 = vadd.f32 %v698, %v784
        %v859 = vadd.f32 %v699, %v784
        %v860 = vadd.f32 %v700, %v784
        %v861 = vadd.f32 %v701, %v789
        %v862 = vadd.f32 %v702, %v789
        %v863 = vadd.f32 %v703, %v789
        %v864 = vadd.f32 %v704, %v789
        %v865 = vadd.f32 %v705, %v794
        %v866 = vadd.f32 %v706, %v794
        %v867 = vadd.f32 %v707, %v794
        %v868 = vadd.f32 %v708, %v794
        %v869 = vadd.f32 %v709, %v799
        %v870 = vadd.f32 %v710, %v799
        %v871 = vadd.f32 %v711, %v799
        %v872 = vadd.f32 %v712, %v799
        %v873 = vadd.f32 %v713, %v804
        %v874 = vadd.f32 %v714, %v804
        %v875 = vadd.f32 %v715, %v804
        %v876 = vadd.f32 %v716, %v804
        %v877 = vadd.f32 %v717, %v809
        %v878 = vadd.f32 %v718, %v809
        %v879 = vadd.f32 %v719, %v809
        %v880 = vadd.f32 %v720, %v809
        %v881 = vadd.f32 %v721, %v814
        %v882 = vadd.f32 %v722, %v814
        %v883 = vadd.f32 %v723, %v814
        %v884 = vadd.f32 %v724, %v814
        %v885 = vadd.f32 %v725, %v819
        %v886 = vadd.f32 %v726, %v819
        %v887 = vadd.f32 %v727, %v819
        %v888 = vadd.f32 %v728, %v819
        %v889 = vadd.f32 %v729, %v824
        %v890 = vadd.f32 %v730, %v824
        %v891 = vadd.f32 %v731, %v824
        %v892 = vadd.f32 %v732, %v824
        %v893 = vadd.f32 %v733, %v829
        %v894 = vadd.f32 %v734, %v829
        %v895 = vadd.f32 %v735, %v829
        %v896 = vadd.f32 %v736, %v829
        %v897 = vadd.f32 %v737, %v834
        %v898 = vadd.f32 %v738, %v834
        %v899 = vadd.f32 %v739, %v834
        %v900 = vadd.f32 %v740, %v834
        %v901 = vadd.f32 %v741, %v839
        %v902 = vadd.f32 %v742, %v839
        %v903 = vadd.f32 %v743, %v839
        %v904 = vadd.f32 %v744, %v839
        %v905 = vmax.f32 %v841, 0.0
        %v906 = vmax.f32 %v842, 0.0
        %v907 = vmax.f32 %v843, 0.0
        %v908 = vmax.f32 %v844, 0.0
        %v909 = vmax.f32 %v845, 0.0
        %v910 = vmax.f32 %v846, 0.0
        %v911 = vmax.f32 %v847, 0.0
        %v912 = vmax.f32 %v848, 0.0
        %v913 = vmax.f32 %v849, 0.0
        %v914 = vmax.f32 %v850, 0.0
        %v915 = vmax.f32 %v851, 0.0
        %v916 = vmax.f32 %v852, 0.0
        %v917 = vmax.f32 %v853, 0.0
        %v918 = vmax.f32 %v854, 0.0
        %v919 = vmax.f32 %v855, 0.0
        %v920 = vmax.f32 %v856, 0.0
        %v921 = vmax.f32 %v857, 0.0
        %v922 = vmax.f32 %v858, 0.0
        %v923 = vmax.f32 %v859, 0.0
        %v924 = vmax.f32 %v860, 0.0
        %v925 = vmax.f32 %v861, 0.0
        %v926 = vmax.f32 %v862, 0.0
        %v927 = vmax.f32 %v863, 0.0
        %v928 = vmax.f32 %v864, 0.0
        %v929 = vmax.f32 %v865, 0.0
        %v930 = vmax.f32 %v866, 0.0
        %v931 = vmax.f32 %v867, 0.0
        %v932 = vmax.f32 %v868, 0.0
        %v933 = vmax.f32 %v869, 0.0
        %v934 = vmax.f32 %v870, 0.0
        %v935 = vmax.f32 %v871, 0.0
        %v936 = vmax.f32 %v872, 0.0
        %v937 = vmax.f32 %v873, 0.0
        %v938 = vmax.f32 %v874, 0.0
        %v939 = vmax.f32 %v875, 0.0
        %v940 = vmax.f32 %v876, 0.0
        %v941 = vmax.f32 %v877, 0.0
        %v942 = vmax.f32 %v878, 0.0
        %v943 = vmax.f32 %v879, 0.0
        %v944 = vmax.f32 %v880, 0.0
        %v945 = vmax.f32 %v881, 0.0
        %v946 = vmax.f32 %v882, 0.0
        %v947 = vmax.f32 %v883, 0.0
        %v948 = vmax.f32 %v884, 0.0
        %v949 = vmax.f32 %v885, 0.0
        %v950 = vmax.f32 %v886, 0.0
        %v951 = vmax.f32 %v887, 0.0
        %v952 = vmax.f32 %v888, 0.0
        %v953 = vmax.f32 %v889, 0.0
        %v954 = vmax.f32 %v890, 0.0
        %v955 = vmax.f32 %v891, 0.0
        %v956 = vmax.f32 %v892, 0.0
        %v957 = vmax.f32 %v893, 0.0
        %v958 = vmax.f32 %v894, 0.0
        %v959 = vmax.f32 %v895, 0.0
        %v960 = vmax.f32 %v896, 0.0
        %v961 = vmax.f32 %v897, 0.0
        %v962 = vmax.f32 %v898, 0.0
        %v963 = vmax.f32 %v899, 0.0
        %v964 = vmax.f32 %v900, 0.0
        %v965 = vmax.f32 %v901, 0.0
        %v966 = vmax.f32 %v902, 0.0
        %v967 = vmax.f32 %v903, 0.0
        %v968 = vmax.f32 %v904, 0.0
        %969 = vst [vmem:[%s250] sm:$0xff] %v905
        %970 = vst [vmem:[%s250 + $0x8] sm:$0xff] %v906
        %971 = vst [vmem:[%s250 + $0x10] sm:$0xff] %v907
        %972 = vst [vmem:[%s250 + $0x18] sm:$0xff] %v908
        %973 = vst [vmem:[%s250 + $0x20] sm:$0xff] %v909
        %974 = vst [vmem:[%s250 + $0x28] sm:$0xff] %v910
        %975 = vst [vmem:[%s250 + $0x30] sm:$0xff] %v911
        %976 = vst [vmem:[%s250 + $0x38] sm:$0xff] %v912
        %977 = vst [vmem:[%s250 + $0x40] sm:$0xff] %v913
        %978 = vst [vmem:[%s250 + $0x48] sm:$0xff] %v914
        %979 = vst [vmem:[%s250 + $0x50] sm:$0xff] %v915
        %980 = vst [vmem:[%s250 + $0x58] sm:$0xff] %v916
        %981 = vst [vmem:[%s250 + $0x60] sm:$0xff] %v917
        %982 = vst [vmem:[%s250 + $0x68] sm:$0xff] %v918
        %983 = vst [vmem:[%s250 + $0x70] sm:$0xff] %v919
        %984 = vst [vmem:[%s250 + $0x78] sm:$0xff] %v920
        %985 = vst [vmem:[%s250 + $0x80] sm:$0xff] %v921
        %986 = vst [vmem:[%s250 + $0x88] sm:$0xff] %v922
        %987 = vst [vmem:[%s250 + $0x90] sm:$0xff] %v923
        %988 = vst [vmem:[%s250 + $0x98] sm:$0xff] %v924
        %989 = vst [vmem:[%s250 + $0xa0] sm:$0xff] %v925
        %990 = vst [vmem:[%s250 + $0xa8] sm:$0xff] %v926
        %991 = vst [vmem:[%s250 + $0xb0] sm:$0xff] %v927
        %992 = vst [vmem:[%s250 + $0xb8] sm:$0xff] %v928
        %993 = vst [vmem:[%s250 + $0xc0] sm:$0xff] %v929
        %994 = vst [vmem:[%s250 + $0xc8] sm:$0xff] %v930
        %995 = vst [vmem:[%s250 + $0xd0] sm:$0xff] %v931
        %996 = vst [vmem:[%s250 + $0xd8] sm:$0xff] %v932
        %997 = vst [vmem:[%s250 + $0xe0] sm:$0xff] %v933
        %998 = vst [vmem:[%s250 + $0xe8] sm:$0xff] %v934
        %999 = vst [vmem:[%s250 + $0xf0] sm:$0xff] %v935
        %1000 = vst [vmem:[%s250 + $0xf8] sm:$0xff] %v936
        %1001 = vst [vmem:[%s250 + $0x100] sm:$0xff] %v937
        %1002 = vst [vmem:[%s250 + $0x108] sm:$0xff] %v938
        %1003 = vst [vmem:[%s250 + $0x110] sm:$0xff] %v939
        %1004 = vst [vmem:[%s250 + $0x118] sm:$0xff] %v940
        %1005 = vst [vmem:[%s250 + $0x120] sm:$0xff] %v941
        %1006 = vst [vmem:[%s250 + $0x128] sm:$0xff] %v942
        %1007 = vst [vmem:[%s250 + $0x130] sm:$0xff] %v943
        %1008 = vst [vmem:[%s250 + $0x138] sm:$0xff] %v944
        %1009 = vst [vmem:[%s250 + $0x140] sm:$0xff] %v945
        %1010 = vst [vmem:[%s250 + $0x148] sm:$0xff] %v946
        %1011 = vst [vmem:[%s250 + $0x150] sm:$0xff] %v947
        %1012 = vst [vmem:[%s250 + $0x158] sm:$0xff] %v948
        %1013 = vst [vmem:[%s250 + $0x160] sm:$0xff] %v949
        %1014 = vst [vmem:[%s250 + $0x168] sm:$0xff] %v950
        %1015 = vst [vmem:[%s250 + $0x170] sm:$0xff] %v951
        %1016 = vst [vmem:[%s250 + $0x178] sm:$0xff] %v952
        %1017 = vst [vmem:[%s250 + $0x180] sm:$0xff] %v953
        %1018 = vst [vmem:[%s250 + $0x188] sm:$0xff] %v954
        %1019 = vst [vmem:[%s250 + $0x190] sm:$0xff] %v955
        %1020 = vst [vmem:[%s250 + $0x198] sm:$0xff] %v956
        %1021 = vst [vmem:[%s250 + $0x1a0] sm:$0xff] %v957
        %1022 = vst [vmem:[%s250 + $0x1a8] sm:$0xff] %v958
        %1023 = vst [vmem:[%s250 + $0x1b0] sm:$0xff] %v959
        %1024 = vst [vmem:[%s250 + $0x1b8] sm:$0xff] %v960
        %1025 = vst [vmem:[%s250 + $0x1c0] sm:$0xff] %v961
        %1026 = vst [vmem:[%s250 + $0x1c8] sm:$0xff] %v962
        %1027 = vst [vmem:[%s250 + $0x1d0] sm:$0xff] %v963
        %1028 = vst [vmem:[%s250 + $0x1d8] sm:$0xff] %v964
        %1029 = vst [vmem:[%s250 + $0x1e0] sm:$0xff] %v965
        %1030 = vst [vmem:[%s250 + $0x1e8] sm:$0xff] %v966
        %1031 = vst [vmem:[%s250 + $0x1f0] sm:$0xff] %v967
        %1032 = vst [vmem:[%s250 + $0x1f8] sm:$0xff] %v968
        %s1033 = smul.u32 4, %s21
        %p1034 = scmp.lt.s32.totalorder %s20, 1
        %s1035 = scalar_select %p1034, %s20, 1
        %p1036 = scmp.lt.s32.totalorder %s1033, 3
        %s1037 = scalar_select %p1036, %s1033, 3
        %s1038 = smul.addr %s1035, 64
        %s1039 = sadd.s32 %s1037, %s1038
        %s1040 = smul.addr %s1039, 8
        %s1041 = scalar_lea.vmem %s4, %s1040
        // Predicated region
        $region41: #{_lambda_.1} parent=35 // pred_check
          %p1042 = pneg %p139
        $region42: #{_lambda_.1} parent=35 // pred_check_branch
          %1044 = sbr.rel (%p1042) target = $region44
        $region43: #{_lambda_.1} parent=35 // pred_region
          %s1045 = smul.u32 4, %s21
        $region44: #{_lambda_.1} parent=35 // pred_fallthru
          _
      $region36: #{_lambda_.1} parent=5 // pred_fallthru
        _
      %p1046 = scmp.le.s32.totalorder 2, %s11
      // Predicated region
      $region45: #{_lambda_.1} parent=5 // pred_check
        %p1047 = pneg %p1046
      $region46: #{_lambda_.1} parent=5 // pred_check_branch
        %1049 = sbr.rel (%p1047) target = $region48
      $region47: #{_lambda_.1} parent=5 // pred_region
        %s1050 = ssub.s32 %s11, 2
        // Predicated region
        $region49: #{_lambda_.1} parent=47 // pred_check
          %p1051 = pneg %p145
        $region50: #{_lambda_.1} parent=47 // pred_check_branch
          %1053 = sbr.rel (%p1051) target = $region52
        $region51: #{_lambda_.1} parent=47 // pred_region
          %s1054 = smul.u32 4, %s23
          %p1055 = scmp.lt.s32.totalorder %s22, 1
          %s1056 = scalar_select %p1055, %s22, 1
          %p1057 = scmp.lt.s32.totalorder %s1054, 3
          %s1058 = scalar_select %p1057, %s1054, 3
          %s1059 = smul.addr %s1056, 64
          %s1060 = sadd.s32 %s1058, %s1059
          %s1061 = smul.addr %s1060, 8
          %s1062 = scalar_lea.vmem %s4, %s1061
        $region52: #{_lambda_.1} parent=47 // pred_fallthru
          _
      $region48: #{_lambda_.1} parent=5 // pred_fallthru
        _
    $region6: #{_lambda_.1} parent=1 // loop_footer
      %s15 = sadd.s32 1, %s11
    $region7: #{_lambda_.1} parent=1 // loop_footer_branch
      %10 = sbr.rel target = $region3
    $region8: #{_lambda_.1} parent=1 // loop_exit
      _
    %1063 = vsyncpa [#allocation3], 1
    %s1064 = scalar_lea.sflag [#allocation3], 1
    %1065 = vsyncpa %s1064, 1

</llo_original>
